<compile_context>
chip_gen: v7x
topology: tpu7x:2x2x1
jax: 0.10.0
libtpu: 0.0.40
codegen_flags: <defaults>
</compile_context>

<pallas_src>
import math

import jax
import jax.numpy as jnp
from jax.experimental import pallas as pl
from jax.experimental.pallas import tpu as pltpu

# ---- problem sizes (small, consistent with the module's forward) ----
B = 2            # batch
T = 8            # time steps
A_DIM = 16       # action_dim
H = 32           # hidden_size
HALF = H // 2    # sinusoidal half-dim
E = 4            # num_embodiments

_LOG10K = math.log(10000.0)


def _encoder_kernel(cat_ref,        # (B,)   int32  SMEM
                    ts_ref,         # (B,)   f32    SMEM
                    actions_ref,    # (B*T, A_DIM)  VMEM
                    w12_ref,        # (E, A_DIM, H) VMEM  = W1 @ W2[:, :H]
                    b12_ref,        # (E, 1, H)     VMEM  = b1 @ W2[:, :H] + b2
                    w2t_ref,        # (E, H, H)     VMEM  = W2[:, H:, :]
                    w3_ref,         # (E, H, H)     VMEM
                    b3_ref,         # (E, 1, H)     VMEM
                    out_ref):       # (B*T, H)      VMEM
    # Duplicated inverse-frequency row [inv_freq, inv_freq] built in-kernel
    # (lane iota + exp: VPU/EUP slots, effectively free next to the MXU).
    lane = jax.lax.broadcasted_iota(jnp.int32, (1, H), 1)          # (1, H)
    half_idx = jnp.where(lane < HALF, lane, lane - HALF).astype(jnp.float32)
    inv_freq2 = jnp.exp(half_idx * (-_LOG10K / HALF))              # (1, H)

    # Static unroll over the (tiny) batch: each element uses its own
    # embodiment-specific weight rows selected with a dynamic first-axis index.
    for b in range(B):
        c = cat_ref[b]                                   # dynamic embodiment id
        t = ts_ref[b]                                    # scalar f32 timestep

        # --- sinusoidal time encoding folded into one (1, H) bias row -------
        # tau = [sin(t*f), cos(t*f)] is constant over T, so
        # tau @ W2[H:] + (b1 @ W2[:H] + b2) collapses into a single row.
        f = t * inv_freq2                                            # (1, H)
        tau = jnp.where(lane < HALF, jnp.sin(f), jnp.cos(f))         # (1, H)
        bias_row = (jnp.dot(tau, w2t_ref[c],
                            preferred_element_type=jnp.float32)
                    + b12_ref[c])                                    # (1, H)

        # --- fused W1 -> W2(action half) matmul + swish ----------------------
        a = actions_ref[b * T:(b + 1) * T, :]            # (T, A_DIM), sublane-aligned
        h = jnp.dot(a, w12_ref[c],
                    preferred_element_type=jnp.float32) + bias_row   # (T, H)
        h = h * jax.nn.sigmoid(h)                        # swish

        # --- W3: final category-specific linear ------------------------------
        y = jnp.dot(h, w3_ref[c],
                    preferred_element_type=jnp.float32) + b3_ref[c]  # (T, H)

        out_ref[b * T:(b + 1) * T, :] = y.astype(out_ref.dtype)


def multi_embodiment_action_encoder(actions, timesteps, cat_ids, params):
    """actions (B,T,A), timesteps (B,) f32, cat_ids (B,) int32 -> (B,T,H) f32."""
    W1, b1, W2, b2, W3, b3 = params

    # Algebraic fusion of W1 into W2's action half (no nonlinearity between).
    W2a = W2[:, :H, :]                                   # (E, H, H)  action half
    W2t = W2[:, H:, :]                                   # (E, H, H)  time half
    W12 = jnp.einsum('eah,ehk->eak', W1, W2a)            # (E, A_DIM, H)
    b12 = (jnp.einsum('eh,ehk->ek', b1, W2a) + b2).reshape(E, 1, H)
    b3r = b3.reshape(E, 1, H)

    # Fold B*T onto sublanes.
    actions_flat = actions.reshape(B * T, A_DIM).astype(jnp.float32)

    vmem = pl.BlockSpec(memory_space=pltpu.MemorySpace.VMEM)
    smem = pl.BlockSpec(memory_space=pltpu.MemorySpace.SMEM)

    # Advisory scheduler hint: this call is fixed-overhead dominated.
    flops = 2 * B * (T * A_DIM * H + H * H + T * H * H)
    transcendentals = B * (H + T * H)                    # sin/cos + sigmoid
    weight_bytes = 4 * E * (A_DIM * H + H + H * H + H * H + H)
    act_bytes = 4 * (B * T * A_DIM + B * T * H) + 8 * B
    cost = pl.CostEstimate(flops=flops,
                           transcendentals=transcendentals,
                           bytes_accessed=weight_bytes + act_bytes)

    out_flat = pl.pallas_call(
        _encoder_kernel,
        out_shape=jax.ShapeDtypeStruct((B * T, H), jnp.float32),
        in_specs=[
            smem,      # cat_ids
            smem,      # timesteps
            vmem,      # actions (B*T, A_DIM)
            vmem,      # W12
            vmem,      # b12
            vmem,      # W2t
            vmem,      # W3
            vmem,      # b3
        ],
        out_specs=vmem,
        cost_estimate=cost,
    )(cat_ids, timesteps.astype(jnp.float32), actions_flat,
      W12, b12, W2t, W3, b3r)

    return out_flat.reshape(B, T, H)


def reference(actions, timesteps, cat_ids, params):
    """Pure-JAX reference mirroring the PyTorch forward."""
    W1, b1, W2, b2, W3, b3 = params
    a_emb = jnp.einsum('bta,bah->bth', actions, W1[cat_ids]) + b1[cat_ids][:, None, :]
    ts = jnp.broadcast_to(timesteps[:, None].astype(jnp.float32), (B, T))
    exponent = -jnp.arange(HALF, dtype=jnp.float32) * (_LOG10K / HALF)
    freqs = ts[..., None] * jnp.exp(exponent)
    tau = jnp.concatenate([jnp.sin(freqs), jnp.cos(freqs)], axis=-1)
    x = jnp.concatenate([a_emb, tau], axis=-1)
    h = jnp.einsum('btk,bkh->bth', x, W2[cat_ids]) + b2[cat_ids][:, None, :]
    h = h * jax.nn.sigmoid(h)
    y = jnp.einsum('btk,bkh->bth', h, W3[cat_ids]) + b3[cat_ids][:, None, :]
    return y


if __name__ == "__main__":
    key = jax.random.PRNGKey(0)
    k_act, k_ts, k_cat, k_w1, k_w2, k_w3 = jax.random.split(key, 6)

    # deterministic synthetic parameters (same shapes as the module's __init__)
    W1 = 0.02 * jax.random.normal(k_w1, (E, A_DIM, H), jnp.float32)
    b1 = jnp.zeros((E, H), jnp.float32)
    W2 = 0.02 * jax.random.normal(k_w2, (E, 2 * H, H), jnp.float32)
    b2 = jnp.zeros((E, H), jnp.float32)
    W3 = 0.02 * jax.random.normal(k_w3, (E, H, H), jnp.float32)
    b3 = jnp.zeros((E, H), jnp.float32)
    params = (W1, b1, W2, b2, W3, b3)

    # inputs
    actions = jax.random.normal(k_act, (B, T, A_DIM), jnp.float32)
    timesteps = jax.random.uniform(k_ts, (B,), jnp.float32, 0.0, 1000.0)
    cat_ids = jax.random.randint(k_cat, (B,), 0, E, jnp.int32)

    out = multi_embodiment_action_encoder(actions, timesteps, cat_ids, params)
    out = jax.block_until_ready(out)

    ref = reference(actions, timesteps, cat_ids, params)
    assert out.shape == (B, T, H), out.shape
    assert jnp.allclose(out, ref, rtol=1e-5, atol=1e-4), (
        float(jnp.max(jnp.abs(out - ref))))

    print("KERNEL_OK")
</pallas_src>

<mosaic_0001>
module attributes {stable_mosaic.version = 11 : i64} {
  func.func @_encoder_kernel(%arg0: memref<2xi32, #tpu.memory_space<smem>>, %arg1: memref<2xf32, #tpu.memory_space<smem>>, %arg2: memref<16x16xf32, #tpu.memory_space<vmem>>, %arg3: memref<4x16x32xf32, #tpu.memory_space<vmem>>, %arg4: memref<4x1x32xf32, #tpu.memory_space<vmem>>, %arg5: memref<4x32x32xf32, #tpu.memory_space<vmem>>, %arg6: memref<4x32x32xf32, #tpu.memory_space<vmem>>, %arg7: memref<4x1x32xf32, #tpu.memory_space<vmem>>, %arg8: memref<16x32xf32, #tpu.memory_space<vmem>>) attributes {dimension_semantics = [], scalar_prefetch = 0 : i64, scratch_operands = 0 : i64, tpu.core_type = #tpu.core_type<tc>} {
    %0 = tpu.iota {dimensions = array<i32: 1>} : vector<1x32xi32>
    %c16_i32 = arith.constant 16 : i32
    %1 = vector.broadcast %c16_i32 : i32 to vector<1x32xi32>
    %2 = arith.cmpi slt, %0, %1 : vector<1x32xi32>
    %c16_i32_0 = arith.constant 16 : i32
    %3 = vector.broadcast %c16_i32_0 : i32 to vector<1x32xi32>
    %4 = arith.subi %0, %3 : vector<1x32xi32>
    %5 = arith.select %2, %0, %4 : vector<1x32xi1>, vector<1x32xi32>
    %6 = arith.sitofp %5 : vector<1x32xi32> to vector<1x32xf32>
    %cst = arith.constant -0.575646281 : f32
    %7 = vector.broadcast %cst : f32 to vector<1x32xf32>
    %8 = arith.mulf %6, %7 : vector<1x32xf32>
    %9 = math.exp %8 : vector<1x32xf32>
    %c0 = arith.constant 0 : index
    %10 = memref.load %arg0[%c0] : memref<2xi32, #tpu.memory_space<smem>>
    %c0_1 = arith.constant 0 : index
    %11 = memref.load %arg1[%c0_1] : memref<2xf32, #tpu.memory_space<smem>>
    %12 = vector.broadcast %11 : f32 to vector<1x32xf32>
    %13 = arith.mulf %12, %9 : vector<1x32xf32>
    %c16_i32_2 = arith.constant 16 : i32
    %14 = vector.broadcast %c16_i32_2 : i32 to vector<1x32xi32>
    %15 = arith.cmpi slt, %0, %14 : vector<1x32xi32>
    %16 = math.sin %13 : vector<1x32xf32>
    %17 = math.cos %13 : vector<1x32xf32>
    %18 = arith.select %15, %16, %17 : vector<1x32xi1>, vector<1x32xf32>
    %19 = arith.index_cast %10 : i32 to index
    %c0_3 = arith.constant 0 : index
    %c0_4 = arith.constant 0 : index
    %20 = vector.load %arg5[%19, %c0_3, %c0_4] : memref<4x32x32xf32, #tpu.memory_space<vmem>>, vector<1x32x32xf32>
    %21 = vector.shape_cast %20 : vector<1x32x32xf32> to vector<32x32xf32>
    %cst_5 = arith.constant dense<0.000000e+00> : vector<1x32xf32>
    %22 = tpu.matmul %18, %21, %cst_5 {dimension_numbers = #tpu.dot_dimension_numbers<[1], [0], [0], [1], [0, 0, 1, 1], [], []>} : vector<1x32xf32>, vector<32x32xf32>, vector<1x32xf32> -> vector<1x32xf32>
    %23 = arith.index_cast %10 : i32 to index
    %c0_6 = arith.constant 0 : index
    %c0_7 = arith.constant 0 : index
    %24 = vector.load %arg4[%23, %c0_6, %c0_7] : memref<4x1x32xf32, #tpu.memory_space<vmem>>, vector<1x1x32xf32>
    %25 = vector.shape_cast %24 : vector<1x1x32xf32> to vector<1x32xf32>
    %26 = arith.addf %22, %25 : vector<1x32xf32>
    %c0_8 = arith.constant 0 : index
    %c0_9 = arith.constant 0 : index
    %27 = vector.load %arg2[%c0_8, %c0_9] : memref<16x16xf32, #tpu.memory_space<vmem>>, vector<8x16xf32>
    %28 = arith.index_cast %10 : i32 to index
    %c0_10 = arith.constant 0 : index
    %c0_11 = arith.constant 0 : index
    %29 = vector.load %arg3[%28, %c0_10, %c0_11] : memref<4x16x32xf32, #tpu.memory_space<vmem>>, vector<1x16x32xf32>
    %30 = vector.shape_cast %29 : vector<1x16x32xf32> to vector<16x32xf32>
    %cst_12 = arith.constant dense<0.000000e+00> : vector<8x32xf32>
    %31 = tpu.matmul %27, %30, %cst_12 {dimension_numbers = #tpu.dot_dimension_numbers<[1], [0], [0], [1], [0, 0, 1, 1], [], []>} : vector<8x16xf32>, vector<16x32xf32>, vector<8x32xf32> -> vector<8x32xf32>
    %32 = vector.broadcast %26 : vector<1x32xf32> to vector<8x32xf32>
    %33 = arith.addf %31, %32 : vector<8x32xf32>
    %34 = arith.negf %33 : vector<8x32xf32>
    %35 = math.exp %34 : vector<8x32xf32>
    %cst_13 = arith.constant 1.000000e+00 : f32
    %36 = vector.broadcast %cst_13 : f32 to vector<8x32xf32>
    %37 = arith.addf %36, %35 : vector<8x32xf32>
    %38 = arith.divf %36, %37 : vector<8x32xf32>
    %39 = arith.mulf %33, %38 : vector<8x32xf32>
    %40 = arith.index_cast %10 : i32 to index
    %c0_14 = arith.constant 0 : index
    %c0_15 = arith.constant 0 : index
    %41 = vector.load %arg6[%40, %c0_14, %c0_15] : memref<4x32x32xf32, #tpu.memory_space<vmem>>, vector<1x32x32xf32>
    %42 = vector.shape_cast %41 : vector<1x32x32xf32> to vector<32x32xf32>
    %cst_16 = arith.constant dense<0.000000e+00> : vector<8x32xf32>
    %43 = tpu.matmul %39, %42, %cst_16 {dimension_numbers = #tpu.dot_dimension_numbers<[1], [0], [0], [1], [0, 0, 1, 1], [], []>} : vector<8x32xf32>, vector<32x32xf32>, vector<8x32xf32> -> vector<8x32xf32>
    %44 = arith.index_cast %10 : i32 to index
    %c0_17 = arith.constant 0 : index
    %c0_18 = arith.constant 0 : index
    %45 = vector.load %arg7[%44, %c0_17, %c0_18] : memref<4x1x32xf32, #tpu.memory_space<vmem>>, vector<1x1x32xf32>
    %46 = vector.shape_cast %45 : vector<1x1x32xf32> to vector<1x32xf32>
    %47 = vector.broadcast %46 : vector<1x32xf32> to vector<8x32xf32>
    %48 = arith.addf %43, %47 : vector<8x32xf32>
    %c0_19 = arith.constant 0 : index
    %c0_20 = arith.constant 0 : index
    %49 = vector.load %arg8[%c0_19, %c0_20] : memref<16x32xf32, #tpu.memory_space<vmem>>, vector<8x32xf32>
    tpu.vector_store %arg8[%c0_19, %c0_20], %48 {strides = array<i32>} : memref<16x32xf32, #tpu.memory_space<vmem>>, vector<8x32xf32>,
    %c1 = arith.constant 1 : index
    %50 = memref.load %arg0[%c1] : memref<2xi32, #tpu.memory_space<smem>>
    %c1_21 = arith.constant 1 : index
    %51 = memref.load %arg1[%c1_21] : memref<2xf32, #tpu.memory_space<smem>>
    %52 = vector.broadcast %51 : f32 to vector<1x32xf32>
    %53 = arith.mulf %52, %9 : vector<1x32xf32>
    %c16_i32_22 = arith.constant 16 : i32
    %54 = vector.broadcast %c16_i32_22 : i32 to vector<1x32xi32>
    %55 = arith.cmpi slt, %0, %54 : vector<1x32xi32>
    %56 = math.sin %53 : vector<1x32xf32>
    %57 = math.cos %53 : vector<1x32xf32>
    %58 = arith.select %55, %56, %57 : vector<1x32xi1>, vector<1x32xf32>
    %59 = arith.index_cast %50 : i32 to index
    %c0_23 = arith.constant 0 : index
    %c0_24 = arith.constant 0 : index
    %60 = vector.load %arg5[%59, %c0_23, %c0_24] : memref<4x32x32xf32, #tpu.memory_space<vmem>>, vector<1x32x32xf32>
    %61 = vector.shape_cast %60 : vector<1x32x32xf32> to vector<32x32xf32>
    %cst_25 = arith.constant dense<0.000000e+00> : vector<1x32xf32>
    %62 = tpu.matmul %58, %61, %cst_25 {dimension_numbers = #tpu.dot_dimension_numbers<[1], [0], [0], [1], [0, 0, 1, 1], [], []>} : vector<1x32xf32>, vector<32x32xf32>, vector<1x32xf32> -> vector<1x32xf32>
    %63 = arith.index_cast %50 : i32 to index
    %c0_26 = arith.constant 0 : index
    %c0_27 = arith.constant 0 : index
    %64 = vector.load %arg4[%63, %c0_26, %c0_27] : memref<4x1x32xf32, #tpu.memory_space<vmem>>, vector<1x1x32xf32>
    %65 = vector.shape_cast %64 : vector<1x1x32xf32> to vector<1x32xf32>
    %66 = arith.addf %62, %65 : vector<1x32xf32>
    %c8 = arith.constant 8 : index
    %c0_28 = arith.constant 0 : index
    %67 = vector.load %arg2[%c8, %c0_28] : memref<16x16xf32, #tpu.memory_space<vmem>>, vector<8x16xf32>
    %68 = arith.index_cast %50 : i32 to index
    %c0_29 = arith.constant 0 : index
    %c0_30 = arith.constant 0 : index
    %69 = vector.load %arg3[%68, %c0_29, %c0_30] : memref<4x16x32xf32, #tpu.memory_space<vmem>>, vector<1x16x32xf32>
    %70 = vector.shape_cast %69 : vector<1x16x32xf32> to vector<16x32xf32>
    %cst_31 = arith.constant dense<0.000000e+00> : vector<8x32xf32>
    %71 = tpu.matmul %67, %70, %cst_31 {dimension_numbers = #tpu.dot_dimension_numbers<[1], [0], [0], [1], [0, 0, 1, 1], [], []>} : vector<8x16xf32>, vector<16x32xf32>, vector<8x32xf32> -> vector<8x32xf32>
    %72 = vector.broadcast %66 : vector<1x32xf32> to vector<8x32xf32>
    %73 = arith.addf %71, %72 : vector<8x32xf32>
    %74 = arith.negf %73 : vector<8x32xf32>
    %75 = math.exp %74 : vector<8x32xf32>
    %cst_32 = arith.constant 1.000000e+00 : f32
    %76 = vector.broadcast %cst_32 : f32 to vector<8x32xf32>
    %77 = arith.addf %76, %75 : vector<8x32xf32>
    %78 = arith.divf %76, %77 : vector<8x32xf32>
    %79 = arith.mulf %73, %78 : vector<8x32xf32>
    %80 = arith.index_cast %50 : i32 to index
    %c0_33 = arith.constant 0 : index
    %c0_34 = arith.constant 0 : index
    %81 = vector.load %arg6[%80, %c0_33, %c0_34] : memref<4x32x32xf32, #tpu.memory_space<vmem>>, vector<1x32x32xf32>
    %82 = vector.shape_cast %81 : vector<1x32x32xf32> to vector<32x32xf32>
    %cst_35 = arith.constant dense<0.000000e+00> : vector<8x32xf32>
    %83 = tpu.matmul %79, %82, %cst_35 {dimension_numbers = #tpu.dot_dimension_numbers<[1], [0], [0], [1], [0, 0, 1, 1], [], []>} : vector<8x32xf32>, vector<32x32xf32>, vector<8x32xf32> -> vector<8x32xf32>
    %84 = arith.index_cast %50 : i32 to index
    %c0_36 = arith.constant 0 : index
    %c0_37 = arith.constant 0 : index
    %85 = vector.load %arg7[%84, %c0_36, %c0_37] : memref<4x1x32xf32, #tpu.memory_space<vmem>>, vector<1x1x32xf32>
    %86 = vector.shape_cast %85 : vector<1x1x32xf32> to vector<1x32xf32>
    %87 = vector.broadcast %86 : vector<1x32xf32> to vector<8x32xf32>
    %88 = arith.addf %83, %87 : vector<8x32xf32>
    %c8_38 = arith.constant 8 : index
    %c0_39 = arith.constant 0 : index
    %89 = vector.load %arg8[%c8_38, %c0_39] : memref<16x32xf32, #tpu.memory_space<vmem>>, vector<8x32xf32>
    tpu.vector_store %arg8[%c8_38, %c0_39], %88 {strides = array<i32>} : memref<16x32xf32, #tpu.memory_space<vmem>>, vector<8x32xf32>,
    return
  }
}

</mosaic_0001>

<llo_original>
// kernel: tpu_custom_call.1
$region0: #{tpu_custom_call.1}
  #allocation0 [shape = 'u32[]', space=smem, size = 0x4, offset = 0x4, fixed_abs, tag = 'smem constant byte address 0x4 - core index']
  #allocation1 [shape = 'u32[144,128]{1,0:T(1,128)}', space=vmem, size = 0x12000, scoped, tag = 'internal scratch']
  %s0 = inlined_call_operand.hbm [shape: s32[2], index: 0, kind: input, shape index: {}]
  %s1 = inlined_call_operand.vmem [shape: f32[2], index: 1, kind: input, shape index: {}]
  %s2 = inlined_call_operand.hbm [shape: f32[16,16], index: 2, kind: input, shape index: {}]
  %s3 = inlined_call_operand.hbm [shape: f32[4,16,32], index: 3, kind: input, shape index: {}]
  %s4 = inlined_call_operand.vmem [shape: f32[4,1,32], index: 4, kind: input, shape index: {}]
  %s5 = inlined_call_operand.hbm [shape: f32[4,32,32], index: 5, kind: input, shape index: {}]
  %s6 = inlined_call_operand.hbm [shape: f32[4,32,32], index: 6, kind: input, shape index: {}]
  %s7 = inlined_call_operand.vmem [shape: f32[4,1,32], index: 7, kind: input, shape index: {}]
  %s8 = inlined_call_operand.hbm [shape: f32[16,32], index: 8, kind: output, shape index: {}]
  %s9 = sld [smem:[#allocation0]]
  $region66: #{tpu_custom_call.1} parent=0
    _
  %s11 = ssub.s32 1, %s9
  %s12 = scalar_select 0, %s11, %s9
  $region1: #{tpu_custom_call.1} parent=0
    #allocation2 [shape = 'u8[512]{0}', space=smem, size = 0x200, scoped, tag = 'input window, operand 0, single buffered']
    #allocation3 [shape = 's32[1]{0}', space=sflag, size = 0x4, scoped, tag = 'scoped memory for tpu_custom_call.1']
    #allocation4 [shape = 's32[1]{0}', space=sflag, size = 0x4, scoped, tag = 'scoped memory for tpu_custom_call.1']
    #allocation5 [shape = 's32[1]{0}', space=sflag, size = 0x4, scoped, tag = 'scoped memory for tpu_custom_call.1']
    #allocation6 [shape = 's32[1]{0}', space=sflag, size = 0x4, scoped, tag = 'scoped memory for tpu_custom_call.1']
    #allocation7 [shape = 'u8[512]{0}', space=smem, size = 0x200, scoped, tag = 'input window, operand 1, single buffered']
    #allocation8 [shape = 'u8[8192]{0}', space=vmem, size = 0x2000, scoped, tag = 'input window, operand 2, single buffered']
    #allocation9 [shape = 'u8[32768]{0}', space=vmem, size = 0x8000, scoped, tag = 'input window, operand 3, single buffered']
    #allocation10 [shape = 's32[1]{0}', space=sflag, size = 0x4, scoped, tag = 'scoped memory for tpu_custom_call.1']
    #allocation11 [shape = 'u8[65536]{0}', space=vmem, size = 0x10000, scoped, tag = 'input window, operand 5, single buffered']
    #allocation12 [shape = 'u8[65536]{0}', space=vmem, size = 0x10000, scoped, tag = 'input window, operand 6, single buffered']
    #allocation13 [shape = 's32[1]{0}', space=sflag, size = 0x4, scoped, tag = 'scoped memory for tpu_custom_call.1']
    #allocation14 [shape = 'u8[8192]{0}', space=vmem, size = 0x2000, scoped, tag = 'output window, operand 0, single buffered']
    %13 = vsyncpa [#allocation5], 0
    %14 = vsyncpa [#allocation6], 0
    %15 = vsyncpa [#allocation3], 0
    %16 = vsyncpa [#allocation10], 0
    %17 = vsyncpa [#allocation13], 0
    %18 = vsyncpa [#allocation4], 0
    // Predicated region
    $region2: #{tpu_custom_call.1} parent=1 // pred_check
      _
    $region3: #{tpu_custom_call.1} parent=1 // pred_check_branch
      %20 = sbr.rel (0) target = $region5
    $region4: #{tpu_custom_call.1} parent=1 // pred_region
      %s22 = ssub.s32 16, 16
      %23 = vsyncadd [#allocation5], %s22
      %26 = dma.hbm_to_smem %s0, 16, [#allocation2], [#allocation5]
    $region5: #{tpu_custom_call.1} parent=1 // pred_fallthru
      _
    // Predicated region
    $region6: #{tpu_custom_call.1} parent=1 // pred_check
      _
    $region7: #{tpu_custom_call.1} parent=1 // pred_check_branch
      %28 = sbr.rel (0) target = $region9
    $region8: #{tpu_custom_call.1} parent=1 // pred_region
      %s30 = ssub.s32 16, 16
      %31 = vsyncadd [#allocation6], %s30
      %s33 = sshll.u32 %s1, 4
      %s34 = int_to_ptr.vmem [resolvable:$true] %s33
      %36 = dma.vmem_to_smem %s34, 16, [#allocation7], [#allocation6]
    $region9: #{tpu_custom_call.1} parent=1 // pred_fallthru
      _
    // Predicated region
    $region10: #{tpu_custom_call.1} parent=1 // pred_check
      _
    $region11: #{tpu_custom_call.1} parent=1 // pred_check_branch
      %38 = sbr.rel (0) target = $region13
    $region12: #{tpu_custom_call.1} parent=1 // pred_region
      %s40 = ssub.s32 256, 256
      %41 = vsyncadd [#allocation3], %s40
      %s42 = sshll.u32 [#allocation8], 4
      %s43 = int_to_ptr.vmem [resolvable:$true] %s42
      %48 = dma.hbm_to_vmem [thread:$0]  %s2, 256, %s43, [#allocation3], 128, 128, 8
    $region13: #{tpu_custom_call.1} parent=1 // pred_fallthru
      _
    // Predicated region
    $region14: #{tpu_custom_call.1} parent=1 // pred_check
      _
    $region15: #{tpu_custom_call.1} parent=1 // pred_check_branch
      %50 = sbr.rel (0) target = $region17
    $region16: #{tpu_custom_call.1} parent=1 // pred_region
      %s52 = ssub.s32 1024, 1024
      %53 = vsyncadd [#allocation10], %s52
      %s54 = sshll.u32 [#allocation9], 4
      %s55 = int_to_ptr.vmem [resolvable:$true] %s54
      %60 = dma.hbm_to_vmem [thread:$0]  %s3, 1024, %s55, [#allocation10], 128, 128, 8
    $region17: #{tpu_custom_call.1} parent=1 // pred_fallthru
      _
    // Predicated region
    $region18: #{tpu_custom_call.1} parent=1 // pred_check
      _
    $region19: #{tpu_custom_call.1} parent=1 // pred_check_branch
      %62 = sbr.rel (0) target = $region21
    $region20: #{tpu_custom_call.1} parent=1 // pred_region
      _
    $region21: #{tpu_custom_call.1} parent=1 // pred_fallthru
      _
    // Predicated region
    $region22: #{tpu_custom_call.1} parent=1 // pred_check
      _
    $region23: #{tpu_custom_call.1} parent=1 // pred_check_branch
      %64 = sbr.rel (0) target = $region25
    $region24: #{tpu_custom_call.1} parent=1 // pred_region
      %s66 = ssub.s32 2048, 2048
      %67 = vsyncadd [#allocation10], %s66
      %s68 = sshll.u32 [#allocation11], 4
      %s69 = int_to_ptr.vmem [resolvable:$true] %s68
      %74 = dma.hbm_to_vmem [thread:$0]  %s5, 2048, %s69, [#allocation10], 128, 128, 8
    $region25: #{tpu_custom_call.1} parent=1 // pred_fallthru
      _
    // Predicated region
    $region26: #{tpu_custom_call.1} parent=1 // pred_check
      _
    $region27: #{tpu_custom_call.1} parent=1 // pred_check_branch
      %76 = sbr.rel (0) target = $region29
    $region28: #{tpu_custom_call.1} parent=1 // pred_region
      %s78 = ssub.s32 2048, 2048
      %79 = vsyncadd [#allocation13], %s78
      %s80 = sshll.u32 [#allocation12], 4
      %s81 = int_to_ptr.vmem [resolvable:$true] %s80
      %86 = dma.hbm_to_vmem [thread:$0]  %s6, 2048, %s81, [#allocation13], 128, 128, 8
    $region29: #{tpu_custom_call.1} parent=1 // pred_fallthru
      _
    // Predicated region
    $region30: #{tpu_custom_call.1} parent=1 // pred_check
      _
    $region31: #{tpu_custom_call.1} parent=1 // pred_check_branch
      %88 = sbr.rel (0) target = $region33
    $region32: #{tpu_custom_call.1} parent=1 // pred_region
      _
    $region33: #{tpu_custom_call.1} parent=1 // pred_fallthru
      _
    // Predicated region
    $region34: #{tpu_custom_call.1} parent=1 // pred_check
      _
    $region35: #{tpu_custom_call.1} parent=1 // pred_check_branch
      %90 = sbr.rel (0) target = $region37
    $region36: #{tpu_custom_call.1} parent=1 // pred_region
      %91 = dma.done [#allocation5], 16
    $region37: #{tpu_custom_call.1} parent=1 // pred_fallthru
      _
    // Predicated region
    $region38: #{tpu_custom_call.1} parent=1 // pred_check
      _
    $region39: #{tpu_custom_call.1} parent=1 // pred_check_branch
      %93 = sbr.rel (0) target = $region41
    $region40: #{tpu_custom_call.1} parent=1 // pred_region
      %94 = dma.done [#allocation6], 16
    $region41: #{tpu_custom_call.1} parent=1 // pred_fallthru
      _
    // Predicated region
    $region42: #{tpu_custom_call.1} parent=1 // pred_check
      _
    $region43: #{tpu_custom_call.1} parent=1 // pred_check_branch
      %96 = sbr.rel (0) target = $region45
    $region44: #{tpu_custom_call.1} parent=1 // pred_region
      %97 = dma.done [#allocation3], 256
    $region45: #{tpu_custom_call.1} parent=1 // pred_fallthru
      _
    // Predicated region
    $region46: #{tpu_custom_call.1} parent=1 // pred_check
      _
    $region47: #{tpu_custom_call.1} parent=1 // pred_check_branch
      %99 = sbr.rel (0) target = $region49
    $region48: #{tpu_custom_call.1} parent=1 // pred_region
      %100 = dma.done [#allocation10], 1024
    $region49: #{tpu_custom_call.1} parent=1 // pred_fallthru
      _
    // Predicated region
    $region50: #{tpu_custom_call.1} parent=1 // pred_check
      _
    $region51: #{tpu_custom_call.1} parent=1 // pred_check_branch
      %102 = sbr.rel (0) target = $region53
    $region52: #{tpu_custom_call.1} parent=1 // pred_region
      %103 = dma.done [#allocation10], 2048
    $region53: #{tpu_custom_call.1} parent=1 // pred_fallthru
      _
    // Predicated region
    $region54: #{tpu_custom_call.1} parent=1 // pred_check
      _
    $region55: #{tpu_custom_call.1} parent=1 // pred_check_branch
      %105 = sbr.rel (0) target = $region57
    $region56: #{tpu_custom_call.1} parent=1 // pred_region
      %106 = dma.done [#allocation13], 2048
    $region57: #{tpu_custom_call.1} parent=1 // pred_fallthru
      _
    %107 = sfence
    %v108 = vlaneseq
    %v109 = vand.u32 %v108, 127
    %vm110 = vcmp.lt.s32.totalorder %v109, 16
    %v111 = vsub.s32 %v109, 16
    %v112 = vsel %vm110, %v109, %v111
    %v113 = vcvt.s32.f32 %v112
    %v114 = vmul.f32 %v113, -0.5756463
    %v115 = vmul.f32 %v114, 1.442695
    %v116 = vpow.pop %v115
    %s117 = sld [smem:[#allocation2]]
    %s118 = sld [smem:[#allocation7]]
    %v119 = vstv %s118
    %v120 = vmul.f32 %v119, %v116
    %v121 = vand.u32 2147483647, %v120
    %vm122 = vcmp.le.f32.partialorder %v121, 0.7853982
    %vm123 = vcmp.lt.s32.totalorder %v120, 0
    %v124 = vand.u32 %v120, 2139095040
    %v125 = vshrl.u32 %v124, 23
    %v126 = vsub.s32 %v125, 127
    %v127 = vand.u32 2147483647, %v120
    %v128 = vand.u32 %v127, 8388607
    %v129 = vor.u32 %v128, 8388608
    %v130 = vsub.s32 0, %v129
    %v131 = vadd.s32 %v126, 1
    %vm132 = vcmp.gt.s32.totalorder %v131, 0
    %v133 = vsel %vm132, %v131, 0
    %v134 = vshrl.u32 %v133, 5
    %v135 = vand.u32 %v133, 31
    %v136 = vsub.s32 32, %v135
    %v137 = vshrl.u32 683565275, %v136
    %v138 = vshll.u32 683565275, %v135
    %v139 = vshrl.u32 2475754826, %v136
    %v140 = vor.u32 %v138, %v139
    %v141 = vshll.u32 2475754826, %v135
    %v142 = vshrl.u32 2131351028, %v136
    %v143 = vor.u32 %v141, %v142
    %v144 = vshll.u32 2131351028, %v135
    %v145 = vshrl.u32 2102212464, %v136
    %v146 = vor.u32 %v144, %v145
    %v147 = vshll.u32 2102212464, %v135
    %v148 = vshrl.u32 920167782, %v136
    %v149 = vor.u32 %v147, %v148
    %v150 = vshll.u32 920167782, %v135
    %v151 = vshrl.u32 1326507024, %v136
    %v152 = vor.u32 %v150, %v151
    %vm153 = vcmp.lt.s32.totalorder %v134, 1
    %vm154 = vcmp.lt.s32.totalorder %v134, 2
    %vm155 = vcmp.lt.s32.totalorder %v134, 3
    %vm156 = vcmp.lt.s32.totalorder %v134, 4
    %v157 = vsel %vm153, %v137, %v140
    %v158 = vsel %vm156, %v146, 2102212464
    %v159 = vsel %vm155, %v143, %v158
    %v160 = vsel %vm154, %v157, %v159
    %v161 = vsel %vm153, %v140, %v143
    %v162 = vsel %vm156, %v149, 920167782
    %v163 = vsel %vm155, %v146, %v162
    %v164 = vsel %vm154, %v161, %v163
    %v165 = vsel %vm153, %v143, %v146
    %v166 = vsel %vm156, %v152, 1326507024
    %v167 = vsel %vm155, %v149, %v166
    %v168 = vsel %vm154, %v165, %v167
    %v169 = vshll.u32 %v129, 8
    %v170 = vmul.u32.u64.compose %v169, %v168
    %v171 = vextract.low.u32 %v170
    %v172 = vextract.high.u32 %v170
    %v173 = vmul.u32.u64.compose %v169, %v164
    %v174 = vextract.low.u32 %v173
    %v175 = vextract.high.u32 %v173
    %v176 = vmul.u32 %v169, %v160
    %v177 = vadd.s32 %v172, %v174
    %vm178 = vc.u32 %v172, %v174
    %v179 = vadd.s32 %v175, 1
    %v180 = vsel %vm178, %v179, %v175
    %v181 = vadd.s32 %v176, %v180
    %v182 = vadd.s32 %v181, 536870912
    %v183 = vshrl.u32 %v182, 30
    %v184 = vshll.u32 %v183, 30
    %v185 = vsub.s32 %v181, %v184
    %vm186 = vcmp.lt.s32.totalorder %v185, 0
    %v187 = vsub.s32 0, %v185
    %v188 = vsel %vm186, %v187, %v185
    %v189 = vclz %v188
    %v190 = vsub.s32 %v189, 2
    %vm191 = vcmp.gt.s32.totalorder 0, %v190
    %v192 = vsel %vm191, 0, %v190
    %v193 = vsub.s32 32, %v192
    %v194 = vshll.u32 %v185, %v192
    %v195 = vshrl.u32 %v177, %v193
    %v196 = vor.u32 %v194, %v195
    %v197 = vsub.s32 4294967266, %v192
    %v198 = vadd.s32 %v197, 127
    %v199 = vshll.u32 %v198, 23
    %v200 = vor.u32 4788187, %v199
    %v201 = vand.u32 2147483647, %v200
    %v203 = vcvt.s32.f32 %v196
    %v204 = vmul.f32 %v203, %v201
    %v205 = vxor.u32 %v204, 2147483648
    %v206 = vsel %vm123, %v205, %v204
    %v207 = vsub.s32 4, %v183
    %v208 = vsel %vm123, %v207, %v183
    %v209 = vsel %vm122, %v120, %v206
    %v210 = vsel %vm122, 0, %v208
    %v211 = vcosq.f32.pop %v209
    %v212 = vsinq.f32.pop %v209
    %vm213 = vweird.f32 %v120
    %v214 = vadd.s32 %v210, 3
    %v215 = vand.u32 %v214, 3
    %vm216 = vcmp.lt.s32.totalorder %v215, 2
    %vm217 = vcmp.eq.s32.totalorder %v215, 0
    %v218 = vxor.u32 %v212, 2147483648
    %v219 = vsel %vm217, %v211, %v218
    %vm220 = vcmp.eq.s32.totalorder %v215, 2
    %v221 = vxor.u32 %v211, 2147483648
    %v222 = vsel %vm220, %v221, %v212
    %v223 = vsel %vm216, %v219, %v222
    %v224 = vsel %vm213, nan, %v223
    %v225 = vand.u32 2147483647, %v120
    %vm226 = vcmp.le.f32.partialorder %v225, 0.7853982
    %vm227 = vcmp.lt.s32.totalorder %v120, 0
    %v228 = vand.u32 %v120, 2139095040
    %v229 = vshrl.u32 %v228, 23
    %v230 = vsub.s32 %v229, 127
    %v231 = vand.u32 2147483647, %v120
    %v232 = vand.u32 %v231, 8388607
    %v233 = vor.u32 %v232, 8388608
    %v234 = vsub.s32 0, %v233
    %v235 = vadd.s32 %v230, 1
    %vm236 = vcmp.gt.s32.totalorder %v235, 0
    %v237 = vsel %vm236, %v235, 0
    %v238 = vshrl.u32 %v237, 5
    %v239 = vand.u32 %v237, 31
    %v240 = vsub.s32 32, %v239
    %v241 = vshrl.u32 683565275, %v240
    %v242 = vshll.u32 683565275, %v239
    %v243 = vshrl.u32 2475754826, %v240
    %v244 = vor.u32 %v242, %v243
    %v245 = vshll.u32 2475754826, %v239
    %v246 = vshrl.u32 2131351028, %v240
    %v247 = vor.u32 %v245, %v246
    %v248 = vshll.u32 2131351028, %v239
    %v249 = vshrl.u32 2102212464, %v240
    %v250 = vor.u32 %v248, %v249
    %v251 = vshll.u32 2102212464, %v239
    %v252 = vshrl.u32 920167782, %v240
    %v253 = vor.u32 %v251, %v252
    %v254 = vshll.u32 920167782, %v239
    %v255 = vshrl.u32 1326507024, %v240
    %v256 = vor.u32 %v254, %v255
    %vm257 = vcmp.lt.s32.totalorder %v238, 1
    %vm258 = vcmp.lt.s32.totalorder %v238, 2
    %vm259 = vcmp.lt.s32.totalorder %v238, 3
    %vm260 = vcmp.lt.s32.totalorder %v238, 4
    %v261 = vsel %vm257, %v241, %v244
    %v262 = vsel %vm260, %v250, 2102212464
    %v263 = vsel %vm259, %v247, %v262
    %v264 = vsel %vm258, %v261, %v263
    %v265 = vsel %vm257, %v244, %v247
    %v266 = vsel %vm260, %v253, 920167782
    %v267 = vsel %vm259, %v250, %v266
    %v268 = vsel %vm258, %v265, %v267
    %v269 = vsel %vm257, %v247, %v250
    %v270 = vsel %vm260, %v256, 1326507024
    %v271 = vsel %vm259, %v253, %v270
    %v272 = vsel %vm258, %v269, %v271
    %v273 = vshll.u32 %v233, 8
    %v274 = vmul.u32.u64.compose %v273, %v272
    %v275 = vextract.low.u32 %v274
    %v276 = vextract.high.u32 %v274
    %v277 = vmul.u32.u64.compose %v273, %v268
    %v278 = vextract.low.u32 %v277
    %v279 = vextract.high.u32 %v277
    %v280 = vmul.u32 %v273, %v264
    %v281 = vadd.s32 %v276, %v278
    %vm282 = vc.u32 %v276, %v278
    %v283 = vadd.s32 %v279, 1
    %v284 = vsel %vm282, %v283, %v279
    %v285 = vadd.s32 %v280, %v284
    %v286 = vadd.s32 %v285, 536870912
    %v287 = vshrl.u32 %v286, 30
    %v288 = vshll.u32 %v287, 30
    %v289 = vsub.s32 %v285, %v288
    %vm290 = vcmp.lt.s32.totalorder %v289, 0
    %v291 = vsub.s32 0, %v289
    %v292 = vsel %vm290, %v291, %v289
    %v293 = vclz %v292
    %v294 = vsub.s32 %v293, 2
    %vm295 = vcmp.gt.s32.totalorder 0, %v294
    %v296 = vsel %vm295, 0, %v294
    %v297 = vsub.s32 32, %v296
    %v298 = vshll.u32 %v289, %v296
    %v299 = vshrl.u32 %v281, %v297
    %v300 = vor.u32 %v298, %v299
    %v301 = vsub.s32 4294967266, %v296
    %v302 = vadd.s32 %v301, 127
    %v303 = vshll.u32 %v302, 23
    %v304 = vor.u32 4788187, %v303
    %v305 = vand.u32 2147483647, %v304
    %v307 = vcvt.s32.f32 %v300
    %v308 = vmul.f32 %v307, %v305
    %v309 = vxor.u32 %v308, 2147483648
    %v310 = vsel %vm227, %v309, %v308
    %v311 = vsub.s32 4, %v287
    %v312 = vsel %vm227, %v311, %v287
    %v313 = vsel %vm226, %v120, %v310
    %v314 = vsel %vm226, 0, %v312
    %v315 = vcosq.f32.pop %v313
    %v316 = vsinq.f32.pop %v313
    %vm317 = vweird.f32 %v120
    %v318 = vand.u32 %v314, 3
    %vm319 = vcmp.lt.s32.totalorder %v318, 2
    %vm320 = vcmp.eq.s32.totalorder %v318, 0
    %v321 = vxor.u32 %v316, 2147483648
    %v322 = vsel %vm320, %v315, %v321
    %vm323 = vcmp.eq.s32.totalorder %v318, 2
    %v324 = vxor.u32 %v315, 2147483648
    %v325 = vsel %vm323, %v324, %v316
    %v326 = vsel %vm319, %v322, %v325
    %v327 = vsel %vm317, nan, %v326
    %v328 = vsel %vm110, %v224, %v327
    %s329 = smul.u32 %s117, 32
    %s330 = scalar_lea.vmem [#allocation11], %s329
    %v331 = vld [vmem:[%s330] sm:$0xff]
    %v332 = vld [vmem:[%s330 + $0x8] sm:$0xff]
    %v333 = vld [vmem:[%s330 + $0x10] sm:$0xff]
    %v334 = vld [vmem:[%s330 + $0x18] sm:$0xff]
    %s335 = scalar_lea.vmem %s4, %s117
    %v336 = vld [vmem:[%s335] sm:$0x1]
    %vm337 = vcmask 261120
    %v339 = vsel %vm337, %v328, 0
    %341 = vmatprep.subr.mxu0 0.0
    %342 = vmatpush1.msra.mxu0 %v331
    %343 = vmatprep.subr.mxu0 0.0
    %344 = vmatpush1.msra.mxu0 %v332
    %345 = vmatprep.subr.mxu0 0.0
    %346 = vmatpush1.msra.mxu0 %v333
    %347 = vmatprep.subr.mxu0 0.0
    %348 = vmatpush1.msra.mxu0 %v334
    %349 = vmatprep.subr.mxu0 0.0
    %350 = vmatpush1.msra.mxu0 0.0
    %351 = vmatprep.subr.mxu0 0.0
    %352 = vmatpush1.msra.mxu0 0.0
    %353 = vmatprep.subr.mxu0 0.0
    %354 = vmatpush1.msra.mxu0 0.0
    %355 = vmatprep.subr.mxu0 0.0
    %356 = vmatpush1.msra.mxu0 0.0
    %357 = vmatprep.subr.mxu0 0.0
    %358 = vmatpush1.msra.mxu0 0.0
    %359 = vmatprep.subr.mxu0 0.0
    %360 = vmatpush1.msra.mxu0 0.0
    %361 = vmatprep.subr.mxu0 0.0
    %362 = vmatpush1.msra.mxu0 0.0
    %363 = vmatprep.subr.mxu0 0.0
    %364 = vmatpush1.msra.mxu0 0.0
    %365 = vmatprep.subr.mxu0 0.0
    %366 = vmatpush1.msra.mxu0 0.0
    %367 = vmatprep.subr.mxu0 0.0
    %368 = vmatpush1.msra.mxu0 0.0
    %369 = vmatprep.subr.mxu0 0.0
    %370 = vmatpush1.msra.mxu0 0.0
    %371 = vmatprep.subr.mxu0 0.0
    %372 = vmatpush1.msra.mxu0 0.0
    %373 = vmatprep.subr.mxu0 0.0
    %374 = vmatpush1.msra.mxu0 0.0
    %375 = vmatprep.subr.mxu0 0.0
    %376 = vmatpush1.msra.mxu0 0.0
    %377 = vmatprep.subr.mxu0 0.0
    %378 = vmatpush1.msra.mxu0 0.0
    %379 = vmatprep.subr.mxu0 0.0
    %380 = vmatpush1.msra.mxu0 0.0
    %381 = vmatprep.subr.mxu0 0.0
    %382 = vmatpush1.msra.mxu0 0.0
    %383 = vmatprep.subr.mxu0 0.0
    %384 = vmatpush1.msra.mxu0 0.0
    %385 = vmatprep.subr.mxu0 0.0
    %386 = vmatpush1.msra.mxu0 0.0
    %387 = vmatprep.subr.mxu0 0.0
    %388 = vmatpush1.msra.mxu0 0.0
    %389 = vmatprep.subr.mxu0 0.0
    %390 = vmatpush1.msra.mxu0 0.0
    %391 = vmatprep.subr.mxu0 0.0
    %392 = vmatpush1.msra.mxu0 0.0
    %393 = vmatprep.subr.mxu0 0.0
    %394 = vmatpush1.msra.mxu0 0.0
    %395 = vmatprep.subr.mxu0 0.0
    %396 = vmatpush1.msra.mxu0 0.0
    %397 = vmatprep.subr.mxu0 0.0
    %398 = vmatpush1.msra.mxu0 0.0
    %399 = vmatprep.subr.mxu0 0.0
    %400 = vmatpush1.msra.mxu0 0.0
    %401 = vmatprep.subr.mxu0 0.0
    %402 = vmatpush1.msra.mxu0 0.0
    %403 = vmatprep.subr.mxu0 0.0
    %404 = vmatpush1.msra.mxu0 0.0
    %405 = vmatprep.mubr.f32.mxu0 0.0
    %406 = vmatmul.mubr.f32.gmra.mrb[0].mxu0 %v339
    %v407 = vpop.f32.mrb[0].mxu0
    %v408 = vadd.f32 %v336, %v407
    %v409 = vpop.f32.mrb[0].mxu0
    %410 = vdwg.mxu0
    %v411 = vld [vmem:[#allocation8] sm:$0xff]
    %s412 = smul.u32 %s117, 16
    %s413 = scalar_lea.vmem [#allocation9], %s412
    %v414 = vld [vmem:[%s413] sm:$0xff]
    %v415 = vld [vmem:[%s413 + $0x8] sm:$0xff]
    %v416 = vlaneseq
    %v417 = vshrl.u32 %v416, 7
    %v418 = vsub.s32 0, %v417
    %v419 = vrot.slane %v408, %v418
    %vm420 = vcmask 130048
    %v422 = vsel %vm420, %v411, 0
    %424 = vmatprep.subr.mxu0 0.0
    %425 = vmatpush1.msra.mxu0 %v414
    %426 = vmatprep.subr.mxu0 0.0
    %427 = vmatpush1.msra.mxu0 %v415
    %428 = vmatprep.subr.mxu0 0.0
    %429 = vmatpush1.msra.mxu0 0.0
    %430 = vmatprep.subr.mxu0 0.0
    %431 = vmatpush1.msra.mxu0 0.0
    %432 = vmatprep.subr.mxu0 0.0
    %433 = vmatpush1.msra.mxu0 0.0
    %434 = vmatprep.subr.mxu0 0.0
    %435 = vmatpush1.msra.mxu0 0.0
    %436 = vmatprep.subr.mxu0 0.0
    %437 = vmatpush1.msra.mxu0 0.0
    %438 = vmatprep.subr.mxu0 0.0
    %439 = vmatpush1.msra.mxu0 0.0
    %440 = vmatprep.subr.mxu0 0.0
    %441 = vmatpush1.msra.mxu0 0.0
    %442 = vmatprep.subr.mxu0 0.0
    %443 = vmatpush1.msra.mxu0 0.0
    %444 = vmatprep.subr.mxu0 0.0
    %445 = vmatpush1.msra.mxu0 0.0
    %446 = vmatprep.subr.mxu0 0.0
    %447 = vmatpush1.msra.mxu0 0.0
    %448 = vmatprep.subr.mxu0 0.0
    %449 = vmatpush1.msra.mxu0 0.0
    %450 = vmatprep.subr.mxu0 0.0
    %451 = vmatpush1.msra.mxu0 0.0
    %452 = vmatprep.subr.mxu0 0.0
    %453 = vmatpush1.msra.mxu0 0.0
    %454 = vmatprep.subr.mxu0 0.0
    %455 = vmatpush1.msra.mxu0 0.0
    %456 = vmatprep.subr.mxu0 0.0
    %457 = vmatpush1.msra.mxu0 0.0
    %458 = vmatprep.subr.mxu0 0.0
    %459 = vmatpush1.msra.mxu0 0.0
    %460 = vmatprep.subr.mxu0 0.0
    %461 = vmatpush1.msra.mxu0 0.0
    %462 = vmatprep.subr.mxu0 0.0
    %463 = vmatpush1.msra.mxu0 0.0
    %464 = vmatprep.subr.mxu0 0.0
    %465 = vmatpush1.msra.mxu0 0.0
    %466 = vmatprep.subr.mxu0 0.0
    %467 = vmatpush1.msra.mxu0 0.0
    %468 = vmatprep.subr.mxu0 0.0
    %469 = vmatpush1.msra.mxu0 0.0
    %470 = vmatprep.subr.mxu0 0.0
    %471 = vmatpush1.msra.mxu0 0.0
    %472 = vmatprep.subr.mxu0 0.0
    %473 = vmatpush1.msra.mxu0 0.0
    %474 = vmatprep.subr.mxu0 0.0
    %475 = vmatpush1.msra.mxu0 0.0
    %476 = vmatprep.subr.mxu0 0.0
    %477 = vmatpush1.msra.mxu0 0.0
    %478 = vmatprep.subr.mxu0 0.0
    %479 = vmatpush1.msra.mxu0 0.0
    %480 = vmatprep.subr.mxu0 0.0
    %481 = vmatpush1.msra.mxu0 0.0
    %482 = vmatprep.subr.mxu0 0.0
    %483 = vmatpush1.msra.mxu0 0.0
    %484 = vmatprep.subr.mxu0 0.0
    %485 = vmatpush1.msra.mxu0 0.0
    %486 = vmatprep.subr.mxu0 0.0
    %487 = vmatpush1.msra.mxu0 0.0
    %488 = vmatprep.mubr.f32.mxu0 0.0
    %489 = vmatmul.mubr.f32.gmra.mrb[0].mxu0 %v422
    %v490 = vpop.f32.mrb[0].mxu0
    %v491 = vadd.f32 %v419, %v490
    %v492 = vpop.f32.mrb[0].mxu0
    %493 = vdwg.mxu0
    %v494 = vxor.u32 %v491, 2147483648
    %v495 = vmul.f32 %v494, 1.442695
    %v496 = vpow.pop %v495
    %v497 = vadd.f32 %v496, 1.0
    %v498 = vrcp.pop %v497
    %v499 = vmul.f32 1.0, %v498
    %v500 = vmul.f32 %v491, %v499
    %s501 = scalar_lea.vmem [#allocation12], %s329
    %v502 = vld [vmem:[%s501] sm:$0xff]
    %v503 = vld [vmem:[%s501 + $0x8] sm:$0xff]
    %v504 = vld [vmem:[%s501 + $0x10] sm:$0xff]
    %v505 = vld [vmem:[%s501 + $0x18] sm:$0xff]
    %s506 = scalar_lea.vmem %s7, %s117
    %v507 = vld [vmem:[%s506] sm:$0x1]
    %v509 = vlaneseq
    %v510 = vshrl.u32 %v509, 7
    %v511 = vsub.s32 0, %v510
    %v512 = vrot.slane %v507, %v511
    %v515 = vsel %vm337, %v500, 0
    %517 = vmatprep.subr.mxu0 0.0
    %518 = vmatpush1.msra.mxu0 %v502
    %519 = vmatprep.subr.mxu0 0.0
    %520 = vmatpush1.msra.mxu0 %v503
    %521 = vmatprep.subr.mxu0 0.0
    %522 = vmatpush1.msra.mxu0 %v504
    %523 = vmatprep.subr.mxu0 0.0
    %524 = vmatpush1.msra.mxu0 %v505
    %525 = vmatprep.subr.mxu0 0.0
    %526 = vmatpush1.msra.mxu0 0.0
    %527 = vmatprep.subr.mxu0 0.0
    %528 = vmatpush1.msra.mxu0 0.0
    %529 = vmatprep.subr.mxu0 0.0
    %530 = vmatpush1.msra.mxu0 0.0
    %531 = vmatprep.subr.mxu0 0.0
    %532 = vmatpush1.msra.mxu0 0.0
    %533 = vmatprep.subr.mxu0 0.0
    %534 = vmatpush1.msra.mxu0 0.0
    %535 = vmatprep.subr.mxu0 0.0
    %536 = vmatpush1.msra.mxu0 0.0
    %537 = vmatprep.subr.mxu0 0.0
    %538 = vmatpush1.msra.mxu0 0.0
    %539 = vmatprep.subr.mxu0 0.0
    %540 = vmatpush1.msra.mxu0 0.0
    %541 = vmatprep.subr.mxu0 0.0
    %542 = vmatpush1.msra.mxu0 0.0
    %543 = vmatprep.subr.mxu0 0.0
    %544 = vmatpush1.msra.mxu0 0.0
    %545 = vmatprep.subr.mxu0 0.0
    %546 = vmatpush1.msra.mxu0 0.0
    %547 = vmatprep.subr.mxu0 0.0
    %548 = vmatpush1.msra.mxu0 0.0
    %549 = vmatprep.subr.mxu0 0.0
    %550 = vmatpush1.msra.mxu0 0.0
    %551 = vmatprep.subr.mxu0 0.0
    %552 = vmatpush1.msra.mxu0 0.0
    %553 = vmatprep.subr.mxu0 0.0
    %554 = vmatpush1.msra.mxu0 0.0
    %555 = vmatprep.subr.mxu0 0.0
    %556 = vmatpush1.msra.mxu0 0.0
    %557 = vmatprep.subr.mxu0 0.0
    %558 = vmatpush1.msra.mxu0 0.0
    %559 = vmatprep.subr.mxu0 0.0
    %560 = vmatpush1.msra.mxu0 0.0
    %561 = vmatprep.subr.mxu0 0.0
    %562 = vmatpush1.msra.mxu0 0.0
    %563 = vmatprep.subr.mxu0 0.0
    %564 = vmatpush1.msra.mxu0 0.0
    %565 = vmatprep.subr.mxu0 0.0
    %566 = vmatpush1.msra.mxu0 0.0
    %567 = vmatprep.subr.mxu0 0.0
    %568 = vmatpush1.msra.mxu0 0.0
    %569 = vmatprep.subr.mxu0 0.0
    %570 = vmatpush1.msra.mxu0 0.0
    %571 = vmatprep.subr.mxu0 0.0
    %572 = vmatpush1.msra.mxu0 0.0
    %573 = vmatprep.subr.mxu0 0.0
    %574 = vmatpush1.msra.mxu0 0.0
    %575 = vmatprep.subr.mxu0 0.0
    %576 = vmatpush1.msra.mxu0 0.0
    %577 = vmatprep.subr.mxu0 0.0
    %578 = vmatpush1.msra.mxu0 0.0
    %579 = vmatprep.subr.mxu0 0.0
    %580 = vmatpush1.msra.mxu0 0.0
    %581 = vmatprep.mubr.f32.mxu0 0.0
    %582 = vmatmul.mubr.f32.gmra.mrb[0].mxu0 %v515
    %v583 = vpop.f32.mrb[0].mxu0
    %v584 = vadd.f32 %v512, %v583
    %v585 = vpop.f32.mrb[0].mxu0
    %586 = vdwg.mxu0
    %587 = vst.msk [vmem:[#allocation14] sm:$0xff] %vm337, %v584
    %s588 = sld [smem:[#allocation2 + $0x1]]
    %s589 = sld [smem:[#allocation7 + $0x1]]
    %v590 = vstv %s589
    %v591 = vmul.f32 %v590, %v116
    %v592 = vand.u32 2147483647, %v591
    %vm593 = vcmp.le.f32.partialorder %v592, 0.7853982
    %vm594 = vcmp.lt.s32.totalorder %v591, 0
    %v595 = vand.u32 %v591, 2139095040
    %v596 = vshrl.u32 %v595, 23
    %v597 = vsub.s32 %v596, 127
    %v598 = vand.u32 2147483647, %v591
    %v599 = vand.u32 %v598, 8388607
    %v600 = vor.u32 %v599, 8388608
    %v601 = vsub.s32 0, %v600
    %v602 = vadd.s32 %v597, 1
    %vm603 = vcmp.gt.s32.totalorder %v602, 0
    %v604 = vsel %vm603, %v602, 0
    %v605 = vshrl.u32 %v604, 5
    %v606 = vand.u32 %v604, 31
    %v607 = vsub.s32 32, %v606
    %v608 = vshrl.u32 683565275, %v607
    %v609 = vshll.u32 683565275, %v606
    %v610 = vshrl.u32 2475754826, %v607
    %v611 = vor.u32 %v609, %v610
    %v612 = vshll.u32 2475754826, %v606
    %v613 = vshrl.u32 2131351028, %v607
    %v614 = vor.u32 %v612, %v613
    %v615 = vshll.u32 2131351028, %v606
    %v616 = vshrl.u32 2102212464, %v607
    %v617 = vor.u32 %v615, %v616
    %v618 = vshll.u32 2102212464, %v606
    %v619 = vshrl.u32 920167782, %v607
    %v620 = vor.u32 %v618, %v619
    %v621 = vshll.u32 920167782, %v606
    %v622 = vshrl.u32 1326507024, %v607
    %v623 = vor.u32 %v621, %v622
    %vm624 = vcmp.lt.s32.totalorder %v605, 1
    %vm625 = vcmp.lt.s32.totalorder %v605, 2
    %vm626 = vcmp.lt.s32.totalorder %v605, 3
    %vm627 = vcmp.lt.s32.totalorder %v605, 4
    %v628 = vsel %vm624, %v608, %v611
    %v629 = vsel %vm627, %v617, 2102212464
    %v630 = vsel %vm626, %v614, %v629
    %v631 = vsel %vm625, %v628, %v630
    %v632 = vsel %vm624, %v611, %v614
    %v633 = vsel %vm627, %v620, 920167782
    %v634 = vsel %vm626, %v617, %v633
    %v635 = vsel %vm625, %v632, %v634
    %v636 = vsel %vm624, %v614, %v617
    %v637 = vsel %vm627, %v623, 1326507024
    %v638 = vsel %vm626, %v620, %v637
    %v639 = vsel %vm625, %v636, %v638
    %v640 = vshll.u32 %v600, 8
    %v641 = vmul.u32.u64.compose %v640, %v639
    %v642 = vextract.low.u32 %v641
    %v643 = vextract.high.u32 %v641
    %v644 = vmul.u32.u64.compose %v640, %v635
    %v645 = vextract.low.u32 %v644
    %v646 = vextract.high.u32 %v644
    %v647 = vmul.u32 %v640, %v631
    %v648 = vadd.s32 %v643, %v645
    %vm649 = vc.u32 %v643, %v645
    %v650 = vadd.s32 %v646, 1
    %v651 = vsel %vm649, %v650, %v646
    %v652 = vadd.s32 %v647, %v651
    %v653 = vadd.s32 %v652, 536870912
    %v654 = vshrl.u32 %v653, 30
    %v655 = vshll.u32 %v654, 30
    %v656 = vsub.s32 %v652, %v655
    %vm657 = vcmp.lt.s32.totalorder %v656, 0
    %v658 = vsub.s32 0, %v656
    %v659 = vsel %vm657, %v658, %v656
    %v660 = vclz %v659
    %v661 = vsub.s32 %v660, 2
    %vm662 = vcmp.gt.s32.totalorder 0, %v661
    %v663 = vsel %vm662, 0, %v661
    %v664 = vsub.s32 32, %v663
    %v665 = vshll.u32 %v656, %v663
    %v666 = vshrl.u32 %v648, %v664
    %v667 = vor.u32 %v665, %v666
    %v668 = vsub.s32 4294967266, %v663
    %v669 = vadd.s32 %v668, 127
    %v670 = vshll.u32 %v669, 23
    %v671 = vor.u32 4788187, %v670
    %v672 = vand.u32 2147483647, %v671
    %v674 = vcvt.s32.f32 %v667
    %v675 = vmul.f32 %v674, %v672
    %v676 = vxor.u32 %v675, 2147483648
    %v677 = vsel %vm594, %v676, %v675
    %v678 = vsub.s32 4, %v654
    %v679 = vsel %vm594, %v678, %v654
    %v680 = vsel %vm593, %v591, %v677
    %v681 = vsel %vm593, 0, %v679
    %v682 = vcosq.f32.pop %v680
    %v683 = vsinq.f32.pop %v680
    %vm684 = vweird.f32 %v591
    %v685 = vadd.s32 %v681, 3
    %v686 = vand.u32 %v685, 3
    %vm687 = vcmp.lt.s32.totalorder %v686, 2
    %vm688 = vcmp.eq.s32.totalorder %v686, 0
    %v689 = vxor.u32 %v683, 2147483648
    %v690 = vsel %vm688, %v682, %v689
    %vm691 = vcmp.eq.s32.totalorder %v686, 2
    %v692 = vxor.u32 %v682, 2147483648
    %v693 = vsel %vm691, %v692, %v683
    %v694 = vsel %vm687, %v690, %v693
    %v695 = vsel %vm684, nan, %v694
    %v696 = vand.u32 2147483647, %v591
    %vm697 = vcmp.le.f32.partialorder %v696, 0.7853982
    %vm698 = vcmp.lt.s32.totalorder %v591, 0
    %v699 = vand.u32 %v591, 2139095040
    %v700 = vshrl.u32 %v699, 23
    %v701 = vsub.s32 %v700, 127
    %v702 = vand.u32 2147483647, %v591
    %v703 = vand.u32 %v702, 8388607
    %v704 = vor.u32 %v703, 8388608
    %v705 = vsub.s32 0, %v704
    %v706 = vadd.s32 %v701, 1
    %vm707 = vcmp.gt.s32.totalorder %v706, 0
    %v708 = vsel %vm707, %v706, 0
    %v709 = vshrl.u32 %v708, 5
    %v710 = vand.u32 %v708, 31
    %v711 = vsub.s32 32, %v710
    %v712 = vshrl.u32 683565275, %v711
    %v713 = vshll.u32 683565275, %v710
    %v714 = vshrl.u32 2475754826, %v711
    %v715 = vor.u32 %v713, %v714
    %v716 = vshll.u32 2475754826, %v710
    %v717 = vshrl.u32 2131351028, %v711
    %v718 = vor.u32 %v716, %v717
    %v719 = vshll.u32 2131351028, %v710
    %v720 = vshrl.u32 2102212464, %v711
    %v721 = vor.u32 %v719, %v720
    %v722 = vshll.u32 2102212464, %v710
    %v723 = vshrl.u32 920167782, %v711
    %v724 = vor.u32 %v722, %v723
    %v725 = vshll.u32 920167782, %v710
    %v726 = vshrl.u32 1326507024, %v711
    %v727 = vor.u32 %v725, %v726
    %vm728 = vcmp.lt.s32.totalorder %v709, 1
    %vm729 = vcmp.lt.s32.totalorder %v709, 2
    %vm730 = vcmp.lt.s32.totalorder %v709, 3
    %vm731 = vcmp.lt.s32.totalorder %v709, 4
    %v732 = vsel %vm728, %v712, %v715
    %v733 = vsel %vm731, %v721, 2102212464
    %v734 = vsel %vm730, %v718, %v733
    %v735 = vsel %vm729, %v732, %v734
    %v736 = vsel %vm728, %v715, %v718
    %v737 = vsel %vm731, %v724, 920167782
    %v738 = vsel %vm730, %v721, %v737
    %v739 = vsel %vm729, %v736, %v738
    %v740 = vsel %vm728, %v718, %v721
    %v741 = vsel %vm731, %v727, 1326507024
    %v742 = vsel %vm730, %v724, %v741
    %v743 = vsel %vm729, %v740, %v742
    %v744 = vshll.u32 %v704, 8
    %v745 = vmul.u32.u64.compose %v744, %v743
    %v746 = vextract.low.u32 %v745
    %v747 = vextract.high.u32 %v745
    %v748 = vmul.u32.u64.compose %v744, %v739
    %v749 = vextract.low.u32 %v748
    %v750 = vextract.high.u32 %v748
    %v751 = vmul.u32 %v744, %v735
    %v752 = vadd.s32 %v747, %v749
    %vm753 = vc.u32 %v747, %v749
    %v754 = vadd.s32 %v750, 1
    %v755 = vsel %vm753, %v754, %v750
    %v756 = vadd.s32 %v751, %v755
    %v757 = vadd.s32 %v756, 536870912
    %v758 = vshrl.u32 %v757, 30
    %v759 = vshll.u32 %v758, 30
    %v760 = vsub.s32 %v756, %v759
    %vm761 = vcmp.lt.s32.totalorder %v760, 0
    %v762 = vsub.s32 0, %v760
    %v763 = vsel %vm761, %v762, %v760
    %v764 = vclz %v763
    %v765 = vsub.s32 %v764, 2
    %vm766 = vcmp.gt.s32.totalorder 0, %v765
    %v767 = vsel %vm766, 0, %v765
    %v768 = vsub.s32 32, %v767
    %v769 = vshll.u32 %v760, %v767
    %v770 = vshrl.u32 %v752, %v768
    %v771 = vor.u32 %v769, %v770
    %v772 = vsub.s32 4294967266, %v767
    %v773 = vadd.s32 %v772, 127
    %v774 = vshll.u32 %v773, 23
    %v775 = vor.u32 4788187, %v774
    %v776 = vand.u32 2147483647, %v775
    %v778 = vcvt.s32.f32 %v771
    %v779 = vmul.f32 %v778, %v776
    %v780 = vxor.u32 %v779, 2147483648
    %v781 = vsel %vm698, %v780, %v779
    %v782 = vsub.s32 4, %v758
    %v783 = vsel %vm698, %v782, %v758
    %v784 = vsel %vm697, %v591, %v781
    %v785 = vsel %vm697, 0, %v783
    %v786 = vcosq.f32.pop %v784
    %v787 = vsinq.f32.pop %v784
    %vm788 = vweird.f32 %v591
    %v789 = vand.u32 %v785, 3
    %vm790 = vcmp.lt.s32.totalorder %v789, 2
    %vm791 = vcmp.eq.s32.totalorder %v789, 0
    %v792 = vxor.u32 %v787, 2147483648
    %v793 = vsel %vm791, %v786, %v792
    %vm794 = vcmp.eq.s32.totalorder %v789, 2
    %v795 = vxor.u32 %v786, 2147483648
    %v796 = vsel %vm794, %v795, %v787
    %v797 = vsel %vm790, %v793, %v796
    %v798 = vsel %vm788, nan, %v797
    %v799 = vsel %vm110, %v695, %v798
    %s800 = smul.u32 %s588, 32
    %s801 = scalar_lea.vmem [#allocation11], %s800
    %v802 = vld [vmem:[%s801] sm:$0xff]
    %v803 = vld [vmem:[%s801 + $0x8] sm:$0xff]
    %v804 = vld [vmem:[%s801 + $0x10] sm:$0xff]
    %v805 = vld [vmem:[%s801 + $0x18] sm:$0xff]
    %s806 = scalar_lea.vmem %s4, %s588
    %v807 = vld [vmem:[%s806] sm:$0x1]
    %v809 = vsel %vm337, %v799, 0
    %811 = vmatprep.subr.mxu0 0.0
    %812 = vmatpush1.msra.mxu0 %v802
    %813 = vmatprep.subr.mxu0 0.0
    %814 = vmatpush1.msra.mxu0 %v803
    %815 = vmatprep.subr.mxu0 0.0
    %816 = vmatpush1.msra.mxu0 %v804
    %817 = vmatprep.subr.mxu0 0.0
    %818 = vmatpush1.msra.mxu0 %v805
    %819 = vmatprep.subr.mxu0 0.0
    %820 = vmatpush1.msra.mxu0 0.0
    %821 = vmatprep.subr.mxu0 0.0
    %822 = vmatpush1.msra.mxu0 0.0
    %823 = vmatprep.subr.mxu0 0.0
    %824 = vmatpush1.msra.mxu0 0.0
    %825 = vmatprep.subr.mxu0 0.0
    %826 = vmatpush1.msra.mxu0 0.0
    %827 = vmatprep.subr.mxu0 0.0
    %828 = vmatpush1.msra.mxu0 0.0
    %829 = vmatprep.subr.mxu0 0.0
    %830 = vmatpush1.msra.mxu0 0.0
    %831 = vmatprep.subr.mxu0 0.0
    %832 = vmatpush1.msra.mxu0 0.0
    %833 = vmatprep.subr.mxu0 0.0
    %834 = vmatpush1.msra.mxu0 0.0
    %835 = vmatprep.subr.mxu0 0.0
    %836 = vmatpush1.msra.mxu0 0.0
    %837 = vmatprep.subr.mxu0 0.0
    %838 = vmatpush1.msra.mxu0 0.0
    %839 = vmatprep.subr.mxu0 0.0
    %840 = vmatpush1.msra.mxu0 0.0
    %841 = vmatprep.subr.mxu0 0.0
    %842 = vmatpush1.msra.mxu0 0.0
    %843 = vmatprep.subr.mxu0 0.0
    %844 = vmatpush1.msra.mxu0 0.0
    %845 = vmatprep.subr.mxu0 0.0
    %846 = vmatpush1.msra.mxu0 0.0
    %847 = vmatprep.subr.mxu0 0.0
    %848 = vmatpush1.msra.mxu0 0.0
    %849 = vmatprep.subr.mxu0 0.0
    %850 = vmatpush1.msra.mxu0 0.0
    %851 = vmatprep.subr.mxu0 0.0
    %852 = vmatpush1.msra.mxu0 0.0
    %853 = vmatprep.subr.mxu0 0.0
    %854 = vmatpush1.msra.mxu0 0.0
    %855 = vmatprep.subr.mxu0 0.0
    %856 = vmatpush1.msra.mxu0 0.0
    %857 = vmatprep.subr.mxu0 0.0
    %858 = vmatpush1.msra.mxu0 0.0
    %859 = vmatprep.subr.mxu0 0.0
    %860 = vmatpush1.msra.mxu0 0.0
    %861 = vmatprep.subr.mxu0 0.0
    %862 = vmatpush1.msra.mxu0 0.0
    %863 = vmatprep.subr.mxu0 0.0
    %864 = vmatpush1.msra.mxu0 0.0
    %865 = vmatprep.subr.mxu0 0.0
    %866 = vmatpush1.msra.mxu0 0.0
    %867 = vmatprep.subr.mxu0 0.0
    %868 = vmatpush1.msra.mxu0 0.0
    %869 = vmatprep.subr.mxu0 0.0
    %870 = vmatpush1.msra.mxu0 0.0
    %871 = vmatprep.subr.mxu0 0.0
    %872 = vmatpush1.msra.mxu0 0.0
    %873 = vmatprep.subr.mxu0 0.0
    %874 = vmatpush1.msra.mxu0 0.0
    %875 = vmatprep.mubr.f32.mxu0 0.0
    %876 = vmatmul.mubr.f32.gmra.mrb[0].mxu0 %v809
    %v877 = vpop.f32.mrb[0].mxu0
    %v878 = vadd.f32 %v807, %v877
    %v879 = vpop.f32.mrb[0].mxu0
    %880 = vdwg.mxu0
    %v881 = vld [vmem:[#allocation8 + $0x8] sm:$0xff]
    %s882 = smul.u32 %s588, 16
    %s883 = scalar_lea.vmem [#allocation9], %s882
    %v884 = vld [vmem:[%s883] sm:$0xff]
    %v885 = vld [vmem:[%s883 + $0x8] sm:$0xff]
    %v886 = vlaneseq
    %v887 = vshrl.u32 %v886, 7
    %v888 = vsub.s32 0, %v887
    %v889 = vrot.slane %v878, %v888
    %v891 = vsel %vm420, %v881, 0
    %893 = vmatprep.subr.mxu0 0.0
    %894 = vmatpush1.msra.mxu0 %v884
    %895 = vmatprep.subr.mxu0 0.0
    %896 = vmatpush1.msra.mxu0 %v885
    %897 = vmatprep.subr.mxu0 0.0
    %898 = vmatpush1.msra.mxu0 0.0
    %899 = vmatprep.subr.mxu0 0.0
    %900 = vmatpush1.msra.mxu0 0.0
    %901 = vmatprep.subr.mxu0 0.0
    %902 = vmatpush1.msra.mxu0 0.0
    %903 = vmatprep.subr.mxu0 0.0
    %904 = vmatpush1.msra.mxu0 0.0
    %905 = vmatprep.subr.mxu0 0.0
    %906 = vmatpush1.msra.mxu0 0.0
    %907 = vmatprep.subr.mxu0 0.0
    %908 = vmatpush1.msra.mxu0 0.0
    %909 = vmatprep.subr.mxu0 0.0
    %910 = vmatpush1.msra.mxu0 0.0
    %911 = vmatprep.subr.mxu0 0.0
    %912 = vmatpush1.msra.mxu0 0.0
    %913 = vmatprep.subr.mxu0 0.0
    %914 = vmatpush1.msra.mxu0 0.0
    %915 = vmatprep.subr.mxu0 0.0
    %916 = vmatpush1.msra.mxu0 0.0
    %917 = vmatprep.subr.mxu0 0.0
    %918 = vmatpush1.msra.mxu0 0.0
    %919 = vmatprep.subr.mxu0 0.0
    %920 = vmatpush1.msra.mxu0 0.0
    %921 = vmatprep.subr.mxu0 0.0
    %922 = vmatpush1.msra.mxu0 0.0
    %923 = vmatprep.subr.mxu0 0.0
    %924 = vmatpush1.msra.mxu0 0.0
    %925 = vmatprep.subr.mxu0 0.0
    %926 = vmatpush1.msra.mxu0 0.0
    %927 = vmatprep.subr.mxu0 0.0
    %928 = vmatpush1.msra.mxu0 0.0
    %929 = vmatprep.subr.mxu0 0.0
    %930 = vmatpush1.msra.mxu0 0.0
    %931 = vmatprep.subr.mxu0 0.0
    %932 = vmatpush1.msra.mxu0 0.0
    %933 = vmatprep.subr.mxu0 0.0
    %934 = vmatpush1.msra.mxu0 0.0
    %935 = vmatprep.subr.mxu0 0.0
    %936 = vmatpush1.msra.mxu0 0.0
    %937 = vmatprep.subr.mxu0 0.0
    %938 = vmatpush1.msra.mxu0 0.0
    %939 = vmatprep.subr.mxu0 0.0
    %940 = vmatpush1.msra.mxu0 0.0
    %941 = vmatprep.subr.mxu0 0.0
    %942 = vmatpush1.msra.mxu0 0.0
    %943 = vmatprep.subr.mxu0 0.0
    %944 = vmatpush1.msra.mxu0 0.0
    %945 = vmatprep.subr.mxu0 0.0
    %946 = vmatpush1.msra.mxu0 0.0
    %947 = vmatprep.subr.mxu0 0.0
    %948 = vmatpush1.msra.mxu0 0.0
    %949 = vmatprep.subr.mxu0 0.0
    %950 = vmatpush1.msra.mxu0 0.0
    %951 = vmatprep.subr.mxu0 0.0
    %952 = vmatpush1.msra.mxu0 0.0
    %953 = vmatprep.subr.mxu0 0.0
    %954 = vmatpush1.msra.mxu0 0.0
    %955 = vmatprep.subr.mxu0 0.0
    %956 = vmatpush1.msra.mxu0 0.0
    %957 = vmatprep.mubr.f32.mxu0 0.0
    %958 = vmatmul.mubr.f32.gmra.mrb[0].mxu0 %v891
    %v959 = vpop.f32.mrb[0].mxu0
    %v960 = vadd.f32 %v889, %v959
    %v961 = vpop.f32.mrb[0].mxu0
    %962 = vdwg.mxu0
    %v963 = vxor.u32 %v960, 2147483648
    %v964 = vmul.f32 %v963, 1.442695
    %v965 = vpow.pop %v964
    %v966 = vadd.f32 %v965, 1.0
    %v967 = vrcp.pop %v966
    %v968 = vmul.f32 1.0, %v967
    %v969 = vmul.f32 %v960, %v968
    %s970 = scalar_lea.vmem [#allocation12], %s800
    %v971 = vld [vmem:[%s970] sm:$0xff]
    %v972 = vld [vmem:[%s970 + $0x8] sm:$0xff]
    %v973 = vld [vmem:[%s970 + $0x10] sm:$0xff]
    %v974 = vld [vmem:[%s970 + $0x18] sm:$0xff]
    %s975 = scalar_lea.vmem %s7, %s588
    %v976 = vld [vmem:[%s975] sm:$0x1]
    %v978 = vlaneseq
    %v979 = vshrl.u32 %v978, 7
    %v980 = vsub.s32 0, %v979
    %v981 = vrot.slane %v976, %v980
    %v984 = vsel %vm337, %v969, 0
    %986 = vmatprep.subr.mxu0 0.0
    %987 = vmatpush1.msra.mxu0 %v971
    %988 = vmatprep.subr.mxu0 0.0
    %989 = vmatpush1.msra.mxu0 %v972
    %990 = vmatprep.subr.mxu0 0.0
    %991 = vmatpush1.msra.mxu0 %v973
    %992 = vmatprep.subr.mxu0 0.0
    %993 = vmatpush1.msra.mxu0 %v974
    %994 = vmatprep.subr.mxu0 0.0
    %995 = vmatpush1.msra.mxu0 0.0
    %996 = vmatprep.subr.mxu0 0.0
    %997 = vmatpush1.msra.mxu0 0.0
    %998 = vmatprep.subr.mxu0 0.0
    %999 = vmatpush1.msra.mxu0 0.0
    %1000 = vmatprep.subr.mxu0 0.0
    %1001 = vmatpush1.msra.mxu0 0.0
    %1002 = vmatprep.subr.mxu0 0.0
    %1003 = vmatpush1.msra.mxu0 0.0
    %1004 = vmatprep.subr.mxu0 0.0
    %1005 = vmatpush1.msra.mxu0 0.0
    %1006 = vmatprep.subr.mxu0 0.0
    %1007 = vmatpush1.msra.mxu0 0.0
    %1008 = vmatprep.subr.mxu0 0.0
    %1009 = vmatpush1.msra.mxu0 0.0
    %1010 = vmatprep.subr.mxu0 0.0
    %1011 = vmatpush1.msra.mxu0 0.0
    %1012 = vmatprep.subr.mxu0 0.0
    %1013 = vmatpush1.msra.mxu0 0.0
    %1014 = vmatprep.subr.mxu0 0.0
    %1015 = vmatpush1.msra.mxu0 0.0
    %1016 = vmatprep.subr.mxu0 0.0
    %1017 = vmatpush1.msra.mxu0 0.0
    %1018 = vmatprep.subr.mxu0 0.0
    %1019 = vmatpush1.msra.mxu0 0.0
    %1020 = vmatprep.subr.mxu0 0.0
    %1021 = vmatpush1.msra.mxu0 0.0
    %1022 = vmatprep.subr.mxu0 0.0
    %1023 = vmatpush1.msra.mxu0 0.0
    %1024 = vmatprep.subr.mxu0 0.0
    %1025 = vmatpush1.msra.mxu0 0.0
    %1026 = vmatprep.subr.mxu0 0.0
    %1027 = vmatpush1.msra.mxu0 0.0
    %1028 = vmatprep.subr.mxu0 0.0
    %1029 = vmatpush1.msra.mxu0 0.0
    %1030 = vmatprep.subr.mxu0 0.0
    %1031 = vmatpush1.msra.mxu0 0.0
    %1032 = vmatprep.subr.mxu0 0.0
    %1033 = vmatpush1.msra.mxu0 0.0
    %1034 = vmatprep.subr.mxu0 0.0
    %1035 = vmatpush1.msra.mxu0 0.0
    %1036 = vmatprep.subr.mxu0 0.0
    %1037 = vmatpush1.msra.mxu0 0.0
    %1038 = vmatprep.subr.mxu0 0.0
    %1039 = vmatpush1.msra.mxu0 0.0
    %1040 = vmatprep.subr.mxu0 0.0
    %1041 = vmatpush1.msra.mxu0 0.0
    %1042 = vmatprep.subr.mxu0 0.0
    %1043 = vmatpush1.msra.mxu0 0.0
    %1044 = vmatprep.subr.mxu0 0.0
    %1045 = vmatpush1.msra.mxu0 0.0
    %1046 = vmatprep.subr.mxu0 0.0
    %1047 = vmatpush1.msra.mxu0 0.0
    %1048 = vmatprep.subr.mxu0 0.0
    %1049 = vmatpush1.msra.mxu0 0.0
    %1050 = vmatprep.mubr.f32.mxu0 0.0
    %1051 = vmatmul.mubr.f32.gmra.mrb[0].mxu0 %v984
    %v1052 = vpop.f32.mrb[0].mxu0
    %v1053 = vadd.f32 %v981, %v1052
    %v1054 = vpop.f32.mrb[0].mxu0
    %1055 = vdwg.mxu0
    %1056 = vst.msk [vmem:[#allocation14 + $0x8] sm:$0xff] %vm337, %v1053
    // Predicated region
    $region58: #{tpu_custom_call.1} parent=1 // pred_check
      _
    $region59: #{tpu_custom_call.1} parent=1 // pred_check_branch
      %1058 = sbr.rel (0) target = $region61
    $region60: #{tpu_custom_call.1} parent=1 // pred_region
      %s1060 = ssub.s32 256, 256
      %1061 = vsyncadd [#allocation4], %s1060
      %s1062 = sshll.u32 [#allocation14], 4
      %s1063 = int_to_ptr.vmem [resolvable:$true] %s1062
      %1068 = dma.vmem_to_hbm [thread:$0]  %s1063, 256, %s8, [#allocation4], 128, 128, 8
    $region61: #{tpu_custom_call.1} parent=1 // pred_fallthru
      _
    // Predicated region
    $region62: #{tpu_custom_call.1} parent=1 // pred_check
      _
    $region63: #{tpu_custom_call.1} parent=1 // pred_check_branch
      %1070 = sbr.rel (0) target = $region65
    $region64: #{tpu_custom_call.1} parent=1 // pred_region
      %1071 = dma.done [#allocation4], 256
    $region65: #{tpu_custom_call.1} parent=1 // pred_fallthru
      _
    %1072 = vsyncpa [#allocation3], 1
    %1073 = vsyncpa [#allocation10], 1
    %1074 = vsyncpa [#allocation13], 1
    %1075 = vsyncpa [#allocation4], 1
    %1076 = vsyncpa [#allocation5], 1
    %1077 = vsyncpa [#allocation6], 1

</llo_original>
